<compile_context>
chip_gen: v5e
topology: v5e:2x2
jax: 0.10.0
libtpu: 0.0.40
codegen_flags: <defaults>
</compile_context>

<pallas_src>
import functools
import math

import jax
import jax.numpy as jnp
from jax import lax
from jax.experimental import pallas as pl
from jax.experimental.pallas import tpu as pltpu


_MASK = -1e30                    # large finite negative: avoids (-inf) - (-inf) NaNs
_VMEM_LIMIT = 32 * 1024 * 1024   # explicit scoped-VMEM budget (fits v5e/v6e/v7x)


def _pick_tile(n, candidates):
    """Largest candidate that divides n, else the full extent (always divides)."""
    for c in candidates:
        if n >= c and n % c == 0:
            return c
    return n


# ----------------- QKV projection: x @ W_qkv^T + b -> (3, H, B*T, D) -----------------

def _qkv_proj_kernel(x_ref, w_ref, b_ref, o_ref, *, n_head, d_head):
    # bf16 operands on the MXU, f32 accumulation, f32 bias add.
    acc = jnp.dot(x_ref[...], w_ref[...], preferred_element_type=jnp.float32)
    acc = acc + b_ref[...]
    out = acc.astype(o_ref.dtype)
    c = n_head * d_head
    # One-time relayout to head-major output: static lane slices -> (3, H, tm, D).
    for s in range(3):
        for h in range(n_head):
            lo = s * c + h * d_head
            o_ref[s, h, :, :] = out[:, lo:lo + d_head]


def _qkv_projection(x2d, w_t, b2d, *, n_head, d_head, out_dtype):
    """x2d: (M, C) bf16, w_t: (C, 3C) bf16, b2d: (1, 3C) f32 -> (3, H, M, D)."""
    M, K = x2d.shape
    n3 = w_t.shape[1]
    tm = _pick_tile(M, (512, 256, 128))
    kernel = functools.partial(_qkv_proj_kernel, n_head=n_head, d_head=d_head)
    # TODO(synk): for very large C (>= 4K) re-introduce K/N grid axes with an f32
    # accumulator; full-width weight blocks assume GPT-2-class widths.
    return pl.pallas_call(
        kernel,
        out_shape=jax.ShapeDtypeStruct((3, n_head, M, d_head), out_dtype),
        grid_spec=pltpu.PrefetchScalarGridSpec(
            num_scalar_prefetch=0,
            grid=(M // tm,),
            in_specs=[
                pl.BlockSpec((tm, K), lambda i: (i, 0)),
                pl.BlockSpec((K, n3), lambda i: (0, 0)),   # constant index: DMA'd once
                pl.BlockSpec((1, n3), lambda i: (0, 0)),
            ],
            out_specs=pl.BlockSpec((3, n_head, tm, d_head), lambda i: (0, 0, i, 0)),
        ),
        compiler_params=pltpu.CompilerParams(
            dimension_semantics=("parallel",),
            vmem_limit_bytes=_VMEM_LIMIT),
    )(x2d, w_t, b2d)


# --------------------------- linear: y = x @ W^T + b ---------------------------

def _linear_kernel(x_ref, w_ref, b_ref, o_ref):
    acc = jnp.dot(x_ref[...], w_ref[...], preferred_element_type=jnp.float32)
    o_ref[...] = (acc + b_ref[...]).astype(o_ref.dtype)


def _linear(x2d, w_t, b2d, *, out_dtype):
    """x2d: (M, K) bf16, w_t: (K, N) bf16, b2d: (1, N) f32 -> (M, N) out_dtype."""
    M, K = x2d.shape
    N = w_t.shape[1]
    tm = _pick_tile(M, (1024, 512, 256, 128))
    return pl.pallas_call(
        _linear_kernel,
        out_shape=jax.ShapeDtypeStruct((M, N), out_dtype),
        grid_spec=pltpu.PrefetchScalarGridSpec(
            num_scalar_prefetch=0,
            grid=(M // tm,),
            in_specs=[
                pl.BlockSpec((tm, K), lambda i: (i, 0)),
                pl.BlockSpec((K, N), lambda i: (0, 0)),    # constant index: DMA'd once
                pl.BlockSpec((1, N), lambda i: (0, 0)),
            ],
            out_specs=pl.BlockSpec((tm, N), lambda i: (i, 0)),
        ),
        compiler_params=pltpu.CompilerParams(
            dimension_semantics=("parallel",),
            vmem_limit_bytes=_VMEM_LIMIT),
    )(x2d, w_t, b2d)


# ------------------------------ flash attention --------------------------------

def _flash_attn_kernel(q_ref, k_ref, v_ref, o_ref, m_ref, l_ref, acc_ref,
                       *, tq, tkv, n_head, d_head):
    qi = pl.program_id(1)
    kv = pl.program_id(2)

    @pl.when(kv == 0)
    def _init():
        m_ref[...] = jnp.full(m_ref.shape, _MASK, dtype=jnp.float32)
        l_ref[...] = jnp.zeros(l_ref.shape, dtype=jnp.float32)
        acc_ref[...] = jnp.zeros(acc_ref.shape, dtype=jnp.float32)

    q_start = qi * tq
    k_start = kv * tkv
    q_last = q_start + tq - 1
    k_last = k_start + tkv - 1

    def update(apply_mask):
        q = q_ref[0]            # (H, tq, D); 1/sqrt(D) already folded into W_q/b_q
        k = k_ref[0]
        v = v_ref[0]
        # All heads in one batched MXU pass: (H,TQ,D)x(H,TKV,D) -> (H,TQ,TKV).
        s = jnp.einsum("hqd,hkd->hqk", q, k, preferred_element_type=jnp.float32)
        if apply_mask:          # only diagonal-crossing tiles pay the iota/select
            row = q_start + lax.broadcasted_iota(jnp.int32, (tq, tkv), 0)
            col = k_start + lax.broadcasted_iota(jnp.int32, (tq, tkv), 1)
            s = jnp.where((col <= row)[None, :, :], s, _MASK)
        # Online (streaming) softmax update in f32 scratch.
        m_prev = m_ref[...]
        m_next = jnp.maximum(m_prev, jnp.max(s, axis=-1, keepdims=True))
        alpha = jnp.exp(m_prev - m_next)
        p = jnp.exp(s - m_next)
        l_ref[...] = alpha * l_ref[...] + jnp.sum(p, axis=-1, keepdims=True)
        acc_ref[...] = alpha * acc_ref[...] + jnp.einsum(
            "hqk,hkd->hqd", p.astype(v.dtype), v,
            preferred_element_type=jnp.float32)
        m_ref[...] = m_next

    # Interior tile entirely inside the causal region: unmasked fast path.
    @pl.when(k_last <= q_start)
    def _full_tile():
        update(False)

    # Diagonal-crossing tile: needs the mask.  Tiles strictly above the diagonal
    # fall through both whens (their K/V DMAs are elided by the clamped index_map).
    @pl.when(jnp.logical_and(k_last > q_start, k_start <= q_last))
    def _diag_tile():
        update(True)

    @pl.when(kv == pl.num_programs(2) - 1)
    def _finalize():
        inv_l = pl.reciprocal(l_ref[...], approx=True)      # divide on the EUP slot
        y = (acc_ref[...] * inv_l).astype(o_ref.dtype)       # (H, tq, D)
        # Lane-dense (tq, H*D) store: merge heads once per q tile, in VMEM.
        for h in range(n_head):
            o_ref[:, h * d_head:(h + 1) * d_head] = y[h]


def _flash_attention(qkv, *, batch, seq, n_head, d_head, tq=None, tkv=None,
                     out_dtype=jnp.bfloat16):
    """qkv: (3, H, B*T, D) bf16 (head-major) -> (B*T, H*D) bf16 (lane-dense)."""
    B, T, H, D = batch, seq, n_head, d_head
    C = H * D
    tq = tq if tq is not None else _pick_tile(T, (256, 128))
    tkv = tkv if tkv is not None else _pick_tile(T, (256, 128))
    assert T % tq == 0 and T % tkv == 0, "T must be divisible by the chosen q/kv tiles"
    nq, nkv = T // tq, T // tkv
    kernel = functools.partial(_flash_attn_kernel, tq=tq, tkv=tkv,
                               n_head=H, d_head=D)

    def last_kv_block(i):
        # Last kv block intersecting the causal region of q tile i (clamp target).
        return ((i + 1) * tq - 1) // tkv

    # Batch boundaries align with tile boundaries (T % tq == 0), so blocks over the
    # flattened B*T rows are indexed as b*nq + i / b*nkv + j.  The K/V index maps
    # clamp j so causally-skipped steps keep the same block index -> DMA elided.
    q_spec = pl.BlockSpec((1, H, tq, D), lambda b, i, j: (0, 0, b * nq + i, 0))
    k_spec = pl.BlockSpec(
        (1, H, tkv, D),
        lambda b, i, j: (1, 0, b * nkv + jnp.minimum(j, last_kv_block(i)), 0))
    v_spec = pl.BlockSpec(
        (1, H, tkv, D),
        lambda b, i, j: (2, 0, b * nkv + jnp.minimum(j, last_kv_block(i)), 0))

    return pl.pallas_call(
        kernel,
        out_shape=jax.ShapeDtypeStruct((B * T, C), out_dtype),
        grid_spec=pltpu.PrefetchScalarGridSpec(
            num_scalar_prefetch=0,
            grid=(B, nq, nkv),
            in_specs=[q_spec, k_spec, v_spec],
            out_specs=pl.BlockSpec((tq, C), lambda b, i, j: (b * nq + i, 0)),
            scratch_shapes=[
                pltpu.VMEM((H, tq, 1), jnp.float32),   # running max m
                pltpu.VMEM((H, tq, 1), jnp.float32),   # running denom l
                pltpu.VMEM((H, tq, D), jnp.float32),   # output accumulator
            ],
        ),
        compiler_params=pltpu.CompilerParams(
            # batch & q-tile axes parallel (megacore on v7x), KV reduction last.
            dimension_semantics=("parallel", "parallel", "arbitrary"),
            vmem_limit_bytes=_VMEM_LIMIT),
    )(qkv, qkv, qkv)


# ------------------------------ full module forward ----------------------------

def causal_self_attention(x, w_attn, b_attn, w_proj, b_proj, n_head,
                          *, tq=None, tkv=None):
    """x: (B, T, C); w_attn: (3C, C); b_attn: (3C,); w_proj: (C, C); b_proj: (C,)."""
    B, T, C = x.shape
    assert C % n_head == 0
    D = C // n_head
    out_dtype = x.dtype
    cdt = jnp.bfloat16   # MXU operand dtype

    # torch.nn.Linear stores (out, in): pre-transpose.  Fold 1/sqrt(D) into the
    # Q output channels of the QKV projection (one-time, f32) so the attention
    # kernel never rescales q.
    scale_cols = jnp.concatenate(
        [jnp.full((C,), 1.0 / math.sqrt(D), jnp.float32),
         jnp.ones((2 * C,), jnp.float32)])
    w_attn_t = (jnp.asarray(w_attn, jnp.float32).T * scale_cols[None, :]).astype(cdt)
    b_attn2d = (jnp.asarray(b_attn, jnp.float32) * scale_cols)[None, :]
    w_proj_t = jnp.asarray(w_proj, jnp.float32).T.astype(cdt)          # (C, C)
    b_proj2d = jnp.asarray(b_proj, jnp.float32)[None, :]               # (1, C)

    x2d = x.astype(cdt).reshape(B * T, C)

    # 1) QKV projection, output already head-major (3, H, B*T, D): no wrapper
    #    transpose / split copies between the projection and attention.
    qkv = _qkv_projection(x2d, w_attn_t, b_attn2d,
                          n_head=n_head, d_head=D, out_dtype=cdt)

    # 2) Flash attention; lane-dense (B*T, C) output (heads merged in-kernel).
    y2d = _flash_attention(qkv, batch=B, seq=T, n_head=n_head, d_head=D,
                           tq=tq, tkv=tkv, out_dtype=cdt)

    # 3) Output projection (cast back to x.dtype).
    out = _linear(y2d, w_proj_t, b_proj2d, out_dtype=out_dtype)
    return out.reshape(B, T, C)


# --------------------------------- reference ------------------------------------

def reference_attention(x, w_attn, b_attn, w_proj, b_proj, n_head):
    """Pure-JAX f32 reference mirroring the PyTorch module."""
    B, T, C = x.shape
    D = C // n_head
    qkv = x @ w_attn.T + b_attn
    q, k, v = jnp.split(qkv, 3, axis=2)
    q = q.reshape(B, T, n_head, D).transpose(0, 2, 1, 3)
    k = k.reshape(B, T, n_head, D).transpose(0, 2, 1, 3)
    v = v.reshape(B, T, n_head, D).transpose(0, 2, 1, 3)
    att = jnp.einsum("bhtd,bhsd->bhts", q, k) / math.sqrt(D)
    mask = jnp.tril(jnp.ones((T, T), dtype=bool))
    att = jnp.where(mask[None, None], att, -jnp.inf)
    att = jax.nn.softmax(att, axis=-1)
    y = jnp.einsum("bhts,bhsd->bhtd", att, v)
    y = y.transpose(0, 2, 1, 3).reshape(B, T, C)
    return y @ w_proj.T + b_proj


def _run_case(key, B, T, C, n_head, *, tq=None, tkv=None):
    kx, kw1, kb1, kw2, kb2 = jax.random.split(key, 5)
    x = jax.random.normal(kx, (B, T, C), dtype=jnp.float32)
    # Deterministic synthetic parameters (shapes follow nn.Linear in __init__).
    w_attn = jax.random.normal(kw1, (3 * C, C), dtype=jnp.float32) * 0.02
    b_attn = jax.random.normal(kb1, (3 * C,), dtype=jnp.float32) * 0.02
    w_proj = jax.random.normal(kw2, (C, C), dtype=jnp.float32) * 0.02
    b_proj = jax.random.normal(kb2, (C,), dtype=jnp.float32) * 0.02

    out = causal_self_attention(x, w_attn, b_attn, w_proj, b_proj, n_head,
                                tq=tq, tkv=tkv)
    out = jax.block_until_ready(out)
    ref = reference_attention(x, w_attn, b_attn, w_proj, b_proj, n_head)
    assert out.shape == (B, T, C)
    # bf16 MXU operands + approx reciprocal -> loosen tolerance vs the f32 reference.
    assert jnp.allclose(out.astype(jnp.float32), ref, atol=2e-2, rtol=2e-2), (
        f"mismatch vs reference for B={B} T={T} C={C} H={n_head}")


if __name__ == "__main__":
    key = jax.random.PRNGKey(0)
    k1, k2, k3 = jax.random.split(key, 3)

    # Small GPT-2-like config (single-tile path): n_embd=32, n_head=4, seq=8, batch=2.
    _run_case(k1, B=2, T=8, C=32, n_head=4)

    # Multi-tile path: online softmax across KV tiles, masked + unmasked tile
    # branches, DMA-elided above-diagonal tiles, batched flattened-row indexing.
    _run_case(k2, B=2, T=256, C=128, n_head=2, tq=128, tkv=128)

    # Default 256-wide tiles (tq=tkv=256), attention grid (1, 2, 2).
    _run_case(k3, B=1, T=512, C=128, n_head=2)

    print("KERNEL_OK")
</pallas_src>

<mosaic_0001>
module attributes {stable_mosaic.version = 11 : i64} {
  func.func @_qkv_proj_kernel(%arg0: i32, %arg1: memref<16x32xbf16, #tpu.memory_space<vmem>>, %arg2: memref<32x96xbf16, #tpu.memory_space<vmem>>, %arg3: memref<1x96xf32, #tpu.memory_space<vmem>>, %arg4: memref<3x4x16x8xbf16, #tpu.memory_space<vmem>>) attributes {dimension_semantics = [#tpu.dimension_semantics<parallel>], iteration_bounds = array<i64: 1>, scalar_prefetch = 0 : i64, scratch_operands = 0 : i64, tpu.core_type = #tpu.core_type<tc>, window_params = [{transform_indices = @transform_0, window_bounds = array<i64: 16, 32>}, {pipeline_mode = #tpu.pipeline_mode<synchronous>, transform_indices = @transform_1, window_bounds = array<i64: 32, 96>}, {pipeline_mode = #tpu.pipeline_mode<synchronous>, transform_indices = @transform_2, window_bounds = array<i64: 1, 96>}, {transform_indices = @transform_3, window_bounds = array<i64: 3, 4, 16, 8>}]} {
    %c0 = arith.constant 0 : index
    %c0_0 = arith.constant 0 : index
    %0 = vector.load %arg1[%c0, %c0_0] : memref<16x32xbf16, #tpu.memory_space<vmem>>, vector<16x32xbf16>
    %c0_1 = arith.constant 0 : index
    %c0_2 = arith.constant 0 : index
    %1 = vector.load %arg2[%c0_1, %c0_2] : memref<32x96xbf16, #tpu.memory_space<vmem>>, vector<32x96xbf16>
    %cst = arith.constant dense<0.000000e+00> : vector<16x96xf32>
    %2 = tpu.matmul %0, %1, %cst {dimension_numbers = #tpu.dot_dimension_numbers<[1], [0], [0], [1], [0, 0, 1, 1], [], []>} : vector<16x32xbf16>, vector<32x96xbf16>, vector<16x96xf32> -> vector<16x96xf32>
    %c0_3 = arith.constant 0 : index
    %c0_4 = arith.constant 0 : index
    %3 = vector.load %arg3[%c0_3, %c0_4] : memref<1x96xf32, #tpu.memory_space<vmem>>, vector<1x96xf32>
    %4 = vector.broadcast %3 : vector<1x96xf32> to vector<16x96xf32>
    %5 = arith.addf %2, %4 : vector<16x96xf32>
    %6 = arith.truncf %5 : vector<16x96xf32> to vector<16x96xbf16>
    %7 = vector.extract_strided_slice %6 {offsets = [0, 0], sizes = [16, 8], strides = [1, 1]} : vector<16x96xbf16> to vector<16x8xbf16>
    %c0_5 = arith.constant 0 : index
    %c0_6 = arith.constant 0 : index
    %c0_7 = arith.constant 0 : index
    %c0_8 = arith.constant 0 : index
    %8 = vector.load %arg4[%c0_5, %c0_6, %c0_7, %c0_8] : memref<3x4x16x8xbf16, #tpu.memory_space<vmem>>, vector<1x1x16x8xbf16>
    %9 = vector.shape_cast %8 : vector<1x1x16x8xbf16> to vector<16x8xbf16>
    %10 = vector.shape_cast %7 : vector<16x8xbf16> to vector<1x1x16x8xbf16>
    tpu.vector_store %arg4[%c0_5, %c0_6, %c0_7, %c0_8], %10 {strides = array<i32>} : memref<3x4x16x8xbf16, #tpu.memory_space<vmem>>, vector<1x1x16x8xbf16>,
    %11 = vector.extract_strided_slice %6 {offsets = [0, 8], sizes = [16, 8], strides = [1, 1]} : vector<16x96xbf16> to vector<16x8xbf16>
    %c0_9 = arith.constant 0 : index
    %c1 = arith.constant 1 : index
    %c0_10 = arith.constant 0 : index
    %c0_11 = arith.constant 0 : index
    %12 = vector.load %arg4[%c0_9, %c1, %c0_10, %c0_11] : memref<3x4x16x8xbf16, #tpu.memory_space<vmem>>, vector<1x1x16x8xbf16>
    %13 = vector.shape_cast %12 : vector<1x1x16x8xbf16> to vector<16x8xbf16>
    %14 = vector.shape_cast %11 : vector<16x8xbf16> to vector<1x1x16x8xbf16>
    tpu.vector_store %arg4[%c0_9, %c1, %c0_10, %c0_11], %14 {strides = array<i32>} : memref<3x4x16x8xbf16, #tpu.memory_space<vmem>>, vector<1x1x16x8xbf16>,
    %15 = vector.extract_strided_slice %6 {offsets = [0, 16], sizes = [16, 8], strides = [1, 1]} : vector<16x96xbf16> to vector<16x8xbf16>
    %c0_12 = arith.constant 0 : index
    %c2 = arith.constant 2 : index
    %c0_13 = arith.constant 0 : index
    %c0_14 = arith.constant 0 : index
    %16 = vector.load %arg4[%c0_12, %c2, %c0_13, %c0_14] : memref<3x4x16x8xbf16, #tpu.memory_space<vmem>>, vector<1x1x16x8xbf16>
    %17 = vector.shape_cast %16 : vector<1x1x16x8xbf16> to vector<16x8xbf16>
    %18 = vector.shape_cast %15 : vector<16x8xbf16> to vector<1x1x16x8xbf16>
    tpu.vector_store %arg4[%c0_12, %c2, %c0_13, %c0_14], %18 {strides = array<i32>} : memref<3x4x16x8xbf16, #tpu.memory_space<vmem>>, vector<1x1x16x8xbf16>,
    %19 = vector.extract_strided_slice %6 {offsets = [0, 24], sizes = [16, 8], strides = [1, 1]} : vector<16x96xbf16> to vector<16x8xbf16>
    %c0_15 = arith.constant 0 : index
    %c3 = arith.constant 3 : index
    %c0_16 = arith.constant 0 : index
    %c0_17 = arith.constant 0 : index
    %20 = vector.load %arg4[%c0_15, %c3, %c0_16, %c0_17] : memref<3x4x16x8xbf16, #tpu.memory_space<vmem>>, vector<1x1x16x8xbf16>
    %21 = vector.shape_cast %20 : vector<1x1x16x8xbf16> to vector<16x8xbf16>
    %22 = vector.shape_cast %19 : vector<16x8xbf16> to vector<1x1x16x8xbf16>
    tpu.vector_store %arg4[%c0_15, %c3, %c0_16, %c0_17], %22 {strides = array<i32>} : memref<3x4x16x8xbf16, #tpu.memory_space<vmem>>, vector<1x1x16x8xbf16>,
    %23 = vector.extract_strided_slice %6 {offsets = [0, 32], sizes = [16, 8], strides = [1, 1]} : vector<16x96xbf16> to vector<16x8xbf16>
    %c1_18 = arith.constant 1 : index
    %c0_19 = arith.constant 0 : index
    %c0_20 = arith.constant 0 : index
    %c0_21 = arith.constant 0 : index
    %24 = vector.load %arg4[%c1_18, %c0_19, %c0_20, %c0_21] : memref<3x4x16x8xbf16, #tpu.memory_space<vmem>>, vector<1x1x16x8xbf16>
    %25 = vector.shape_cast %24 : vector<1x1x16x8xbf16> to vector<16x8xbf16>
    %26 = vector.shape_cast %23 : vector<16x8xbf16> to vector<1x1x16x8xbf16>
    tpu.vector_store %arg4[%c1_18, %c0_19, %c0_20, %c0_21], %26 {strides = array<i32>} : memref<3x4x16x8xbf16, #tpu.memory_space<vmem>>, vector<1x1x16x8xbf16>,
    %27 = vector.extract_strided_slice %6 {offsets = [0, 40], sizes = [16, 8], strides = [1, 1]} : vector<16x96xbf16> to vector<16x8xbf16>
    %c1_22 = arith.constant 1 : index
    %c1_23 = arith.constant 1 : index
    %c0_24 = arith.constant 0 : index
    %c0_25 = arith.constant 0 : index
    %28 = vector.load %arg4[%c1_22, %c1_23, %c0_24, %c0_25] : memref<3x4x16x8xbf16, #tpu.memory_space<vmem>>, vector<1x1x16x8xbf16>
    %29 = vector.shape_cast %28 : vector<1x1x16x8xbf16> to vector<16x8xbf16>
    %30 = vector.shape_cast %27 : vector<16x8xbf16> to vector<1x1x16x8xbf16>
    tpu.vector_store %arg4[%c1_22, %c1_23, %c0_24, %c0_25], %30 {strides = array<i32>} : memref<3x4x16x8xbf16, #tpu.memory_space<vmem>>, vector<1x1x16x8xbf16>,
    %31 = vector.extract_strided_slice %6 {offsets = [0, 48], sizes = [16, 8], strides = [1, 1]} : vector<16x96xbf16> to vector<16x8xbf16>
    %c1_26 = arith.constant 1 : index
    %c2_27 = arith.constant 2 : index
    %c0_28 = arith.constant 0 : index
    %c0_29 = arith.constant 0 : index
    %32 = vector.load %arg4[%c1_26, %c2_27, %c0_28, %c0_29] : memref<3x4x16x8xbf16, #tpu.memory_space<vmem>>, vector<1x1x16x8xbf16>
    %33 = vector.shape_cast %32 : vector<1x1x16x8xbf16> to vector<16x8xbf16>
    %34 = vector.shape_cast %31 : vector<16x8xbf16> to vector<1x1x16x8xbf16>
    tpu.vector_store %arg4[%c1_26, %c2_27, %c0_28, %c0_29], %34 {strides = array<i32>} : memref<3x4x16x8xbf16, #tpu.memory_space<vmem>>, vector<1x1x16x8xbf16>,
    %35 = vector.extract_strided_slice %6 {offsets = [0, 56], sizes = [16, 8], strides = [1, 1]} : vector<16x96xbf16> to vector<16x8xbf16>
    %c1_30 = arith.constant 1 : index
    %c3_31 = arith.constant 3 : index
    %c0_32 = arith.constant 0 : index
    %c0_33 = arith.constant 0 : index
    %36 = vector.load %arg4[%c1_30, %c3_31, %c0_32, %c0_33] : memref<3x4x16x8xbf16, #tpu.memory_space<vmem>>, vector<1x1x16x8xbf16>
    %37 = vector.shape_cast %36 : vector<1x1x16x8xbf16> to vector<16x8xbf16>
    %38 = vector.shape_cast %35 : vector<16x8xbf16> to vector<1x1x16x8xbf16>
    tpu.vector_store %arg4[%c1_30, %c3_31, %c0_32, %c0_33], %38 {strides = array<i32>} : memref<3x4x16x8xbf16, #tpu.memory_space<vmem>>, vector<1x1x16x8xbf16>,
    %39 = vector.extract_strided_slice %6 {offsets = [0, 64], sizes = [16, 8], strides = [1, 1]} : vector<16x96xbf16> to vector<16x8xbf16>
    %c2_34 = arith.constant 2 : index
    %c0_35 = arith.constant 0 : index
    %c0_36 = arith.constant 0 : index
    %c0_37 = arith.constant 0 : index
    %40 = vector.load %arg4[%c2_34, %c0_35, %c0_36, %c0_37] : memref<3x4x16x8xbf16, #tpu.memory_space<vmem>>, vector<1x1x16x8xbf16>
    %41 = vector.shape_cast %40 : vector<1x1x16x8xbf16> to vector<16x8xbf16>
    %42 = vector.shape_cast %39 : vector<16x8xbf16> to vector<1x1x16x8xbf16>
    tpu.vector_store %arg4[%c2_34, %c0_35, %c0_36, %c0_37], %42 {strides = array<i32>} : memref<3x4x16x8xbf16, #tpu.memory_space<vmem>>, vector<1x1x16x8xbf16>,
    %43 = vector.extract_strided_slice %6 {offsets = [0, 72], sizes = [16, 8], strides = [1, 1]} : vector<16x96xbf16> to vector<16x8xbf16>
    %c2_38 = arith.constant 2 : index
    %c1_39 = arith.constant 1 : index
    %c0_40 = arith.constant 0 : index
    %c0_41 = arith.constant 0 : index
    %44 = vector.load %arg4[%c2_38, %c1_39, %c0_40, %c0_41] : memref<3x4x16x8xbf16, #tpu.memory_space<vmem>>, vector<1x1x16x8xbf16>
    %45 = vector.shape_cast %44 : vector<1x1x16x8xbf16> to vector<16x8xbf16>
    %46 = vector.shape_cast %43 : vector<16x8xbf16> to vector<1x1x16x8xbf16>
    tpu.vector_store %arg4[%c2_38, %c1_39, %c0_40, %c0_41], %46 {strides = array<i32>} : memref<3x4x16x8xbf16, #tpu.memory_space<vmem>>, vector<1x1x16x8xbf16>,
    %47 = vector.extract_strided_slice %6 {offsets = [0, 80], sizes = [16, 8], strides = [1, 1]} : vector<16x96xbf16> to vector<16x8xbf16>
    %c2_42 = arith.constant 2 : index
    %c2_43 = arith.constant 2 : index
    %c0_44 = arith.constant 0 : index
    %c0_45 = arith.constant 0 : index
    %48 = vector.load %arg4[%c2_42, %c2_43, %c0_44, %c0_45] : memref<3x4x16x8xbf16, #tpu.memory_space<vmem>>, vector<1x1x16x8xbf16>
    %49 = vector.shape_cast %48 : vector<1x1x16x8xbf16> to vector<16x8xbf16>
    %50 = vector.shape_cast %47 : vector<16x8xbf16> to vector<1x1x16x8xbf16>
    tpu.vector_store %arg4[%c2_42, %c2_43, %c0_44, %c0_45], %50 {strides = array<i32>} : memref<3x4x16x8xbf16, #tpu.memory_space<vmem>>, vector<1x1x16x8xbf16>,
    %51 = vector.extract_strided_slice %6 {offsets = [0, 88], sizes = [16, 8], strides = [1, 1]} : vector<16x96xbf16> to vector<16x8xbf16>
    %c2_46 = arith.constant 2 : index
    %c3_47 = arith.constant 3 : index
    %c0_48 = arith.constant 0 : index
    %c0_49 = arith.constant 0 : index
    %52 = vector.load %arg4[%c2_46, %c3_47, %c0_48, %c0_49] : memref<3x4x16x8xbf16, #tpu.memory_space<vmem>>, vector<1x1x16x8xbf16>
    %53 = vector.shape_cast %52 : vector<1x1x16x8xbf16> to vector<16x8xbf16>
    %54 = vector.shape_cast %51 : vector<16x8xbf16> to vector<1x1x16x8xbf16>
    tpu.vector_store %arg4[%c2_46, %c3_47, %c0_48, %c0_49], %54 {strides = array<i32>} : memref<3x4x16x8xbf16, #tpu.memory_space<vmem>>, vector<1x1x16x8xbf16>,
    return
  }
  func.func @transform_0(%arg0: i32) -> (i32, i32) {
    %c0_i32 = arith.constant 0 : i32
    %c0_i32_0 = arith.constant 0 : i32
    return %arg0, %c0_i32 : i32, i32
  }
  func.func @transform_1(%arg0: i32) -> (i32, i32) {
    %c0_i32 = arith.constant 0 : i32
    %c0_i32_0 = arith.constant 0 : i32
    %c0_i32_1 = arith.constant 0 : i32
    return %c0_i32, %c0_i32_0 : i32, i32
  }
  func.func @transform_2(%arg0: i32) -> (i32, i32) {
    %c0_i32 = arith.constant 0 : i32
    %c0_i32_0 = arith.constant 0 : i32
    %c0_i32_1 = arith.constant 0 : i32
    return %c0_i32, %c0_i32_0 : i32, i32
  }
  func.func @transform_3(%arg0: i32) -> (i32, i32, i32, i32) {
    %c0_i32 = arith.constant 0 : i32
    %c0_i32_0 = arith.constant 0 : i32
    %c0_i32_1 = arith.constant 0 : i32
    %c0_i32_2 = arith.constant 0 : i32
    return %c0_i32, %c0_i32_0, %arg0, %c0_i32_1 : i32, i32, i32, i32
  }
}

</mosaic_0001>

<llo_original>
// kernel: tpu_custom_call.1
$region0: #{tpu_custom_call.1}
  #allocation0 [shape = 'u32[]', space=smem, size = 0x4, offset = 0x4, fixed_abs, tag = 'smem constant byte address 0x4 - core index']
  #allocation1 [shape = 'u32[72,128]{1,0:T(1,128)}', space=vmem, size = 0x9000, scoped, tag = 'internal scratch']
  %s0 = inlined_call_operand.hbm [shape: bf16[16,32], index: 0, kind: input, shape index: {}]
  %s1 = inlined_call_operand.hbm [shape: bf16[32,96], index: 1, kind: input, shape index: {}]
  %s2 = inlined_call_operand.vmem [shape: f32[1,96], index: 2, kind: input, shape index: {}]
  %s3 = inlined_call_operand.vmem [shape: bf16[3,4,16,8], index: 3, kind: output, shape index: {}]
  %s4 = sld [smem:[#allocation0]]
  $region30: #{tpu_custom_call.1} parent=0
    _
  %s6 = ssub.s32 1, %s4
  %s7 = scalar_select 0, %s6, %s4
  $region1: #{tpu_custom_call.1} parent=0
    #allocation2 [shape = 'u8[4096]{0}', space=vmem, size = 0x1000, scoped, tag = 'input window, operand 0, single buffered']
    #allocation3 [shape = 's32[1]{0}', space=sflag, size = 0x4, scoped, tag = 'scoped memory for tpu_custom_call.1']
    #allocation4 [shape = 'u8[8192]{0}', space=vmem, size = 0x2000, scoped, tag = 'input window, operand 1, single buffered']
    #allocation5 [shape = 's32[1]{0}', space=sflag, size = 0x4, scoped, tag = 'scoped memory for tpu_custom_call.1']
    %8 = vsyncpa [#allocation3], 0
    %9 = vsyncpa [#allocation5], 0
    // Predicated region
    $region2: #{tpu_custom_call.1} parent=1 // pred_check
      _
    $region3: #{tpu_custom_call.1} parent=1 // pred_check_branch
      %11 = sbr.rel (0) target = $region5
    $region4: #{tpu_custom_call.1} parent=1 // pred_region
      %13 = vsyncadd [#allocation3], 0
      %s14 = sshll.u32 %s0, 4
      %s15 = int_to_ptr.hbm [resolvable:$true] %s14
      %s16 = sshll.u32 [#allocation2], 4
      %s17 = int_to_ptr.vmem [resolvable:$true] %s16
      %22 = dma.hbm_to_vmem [thread:$0]  %s15, 128, %s17, [#allocation3], 64, 64, 4
    $region5: #{tpu_custom_call.1} parent=1 // pred_fallthru
      _
    // Predicated region
    $region6: #{tpu_custom_call.1} parent=1 // pred_check
      _
    $region7: #{tpu_custom_call.1} parent=1 // pred_check_branch
      %24 = sbr.rel (0) target = $region9
    $region8: #{tpu_custom_call.1} parent=1 // pred_region
      %26 = vsyncadd [#allocation5], 0
      %s27 = sshll.u32 %s1, 4
      %s28 = int_to_ptr.hbm [resolvable:$true] %s27
      %s29 = sshll.u32 [#allocation4], 4
      %s30 = int_to_ptr.vmem [resolvable:$true] %s29
      %35 = dma.hbm_to_vmem [thread:$0]  %s28, 256, %s30, [#allocation5], 64, 64, 4
    $region9: #{tpu_custom_call.1} parent=1 // pred_fallthru
      _
    // Predicated region
    $region10: #{tpu_custom_call.1} parent=1 // pred_check
      _
    $region11: #{tpu_custom_call.1} parent=1 // pred_check_branch
      %37 = sbr.rel (0) target = $region13
    $region12: #{tpu_custom_call.1} parent=1 // pred_region
      _
    $region13: #{tpu_custom_call.1} parent=1 // pred_fallthru
      _
    // Predicated region
    $region14: #{tpu_custom_call.1} parent=1 // pred_check
      _
    $region15: #{tpu_custom_call.1} parent=1 // pred_check_branch
      %39 = sbr.rel (0) target = $region17
    $region16: #{tpu_custom_call.1} parent=1 // pred_region
      %41 = dma.done [#allocation3], 128
    $region17: #{tpu_custom_call.1} parent=1 // pred_fallthru
      _
    // Predicated region
    $region18: #{tpu_custom_call.1} parent=1 // pred_check
      _
    $region19: #{tpu_custom_call.1} parent=1 // pred_check_branch
      %43 = sbr.rel (0) target = $region21
    $region20: #{tpu_custom_call.1} parent=1 // pred_region
      %45 = dma.done [#allocation5], 256
    $region21: #{tpu_custom_call.1} parent=1 // pred_fallthru
      _
    %v47 = vld [vmem:[#allocation2] sm:$0xf]
    %v48 = vld [vmem:[#allocation2 + $0x4] sm:$0xf]
    %v49 = vld [vmem:[#allocation4] sm:$0xf]
    %v50 = vld [vmem:[#allocation4 + $0x4] sm:$0xf]
    %v51 = vld [vmem:[#allocation4 + $0x8] sm:$0xf]
    %v52 = vld [vmem:[#allocation4 + $0xc] sm:$0xf]
    %v53 = vld [vmem:[%s2] sm:$0x1]
    %v55 = vperm.slane %v53, 0
    %v59 = vunpack.c.l.b16 %v47
    %v60 = vunpack.c.l.b16 %v48
    %v61 = vpack.c.b16 %v60, %v59
    %v66 = vunpack.c.l.b16 %v49
    %v67 = vunpack.c.l.b16 %v50
    %v68 = vunpack.c.l.b16 %v51
    %v69 = vunpack.c.l.b16 %v52
    %v70 = vpack.c.b16 %v67, %v66
    %v71 = vpack.c.b16 %v69, %v68
    %vm74 = vcmask 261120
    %v76 = vsel %vm74, %v61, 0
    %78 = vmatpush.bf16.msra.mxu0 0
    %79 = vmatpush.bf16.msra.mxu0 0
    %80 = vmatpush.bf16.msra.mxu0 0
    %81 = vmatpush.bf16.msra.mxu0 0
    %82 = vmatpush.bf16.msra.mxu0 0
    %83 = vmatpush.bf16.msra.mxu0 0
    %84 = vmatpush.bf16.msra.mxu0 %v71
    %85 = vmatpush.bf16.msra.mxu0 %v70
    %86 = vmatmul.bf16.gmra.mxu0 %v76
    %v87 = vpop.f32.mrf.mxu0
    %v88 = vadd.f32 %v55, %v87
    %v89 = vpop.f32.mrf.mxu0
    %v90 = vadd.f32 %v55, %v89
    %91 = vdwg.mxu0
    %v92 = vpack.c.bf16 %v88, %v88
    %v93 = vpack.c.bf16 %v90, %v90
    %vm94 = vcmask 60416
    %95 = vst.msk [vmem:[%s3] sm:$0xf] %vm94, %v92
    %96 = vst.msk [vmem:[%s3 + $0x4] sm:$0xf] %vm94, %v93
    %99 = vrot.lane.b32.xlu0 %v92, 120
    %v100 = vpop.permute.xlu0 %99
    %101 = vrot.lane.b32.xlu0 %v93, 120
    %v102 = vpop.permute.xlu0 %101
    %s105 = scalar_lea.vmem %s3, 8
    %106 = vst.msk [vmem:[%s105] sm:$0xf] %vm94, %v100
    %107 = vst.msk [vmem:[%s105 + $0x4] sm:$0xf] %vm94, %v102
    %108 = vrot.lane.b32.xlu0 %v92, 112
    %v109 = vpop.permute.xlu0 %108
    %110 = vrot.lane.b32.xlu0 %v93, 112
    %v111 = vpop.permute.xlu0 %110
    %s114 = scalar_lea.vmem %s3, 16
    %115 = vst.msk [vmem:[%s114] sm:$0xf] %vm94, %v109
    %116 = vst.msk [vmem:[%s114 + $0x4] sm:$0xf] %vm94, %v111
    %117 = vrot.lane.b32.xlu0 %v92, 104
    %v118 = vpop.permute.xlu0 %117
    %119 = vrot.lane.b32.xlu0 %v93, 104
    %v120 = vpop.permute.xlu0 %119
    %s123 = scalar_lea.vmem %s3, 24
    %124 = vst.msk [vmem:[%s123] sm:$0xf] %vm94, %v118
    %125 = vst.msk [vmem:[%s123 + $0x4] sm:$0xf] %vm94, %v120
    %126 = vrot.lane.b32.xlu0 %v92, 96
    %v127 = vpop.permute.xlu0 %126
    %128 = vrot.lane.b32.xlu0 %v93, 96
    %v129 = vpop.permute.xlu0 %128
    %s132 = scalar_lea.vmem %s3, 32
    %133 = vst.msk [vmem:[%s132] sm:$0xf] %vm94, %v127
    %134 = vst.msk [vmem:[%s132 + $0x4] sm:$0xf] %vm94, %v129
    %135 = vrot.lane.b32.xlu0 %v92, 88
    %v136 = vpop.permute.xlu0 %135
    %137 = vrot.lane.b32.xlu0 %v93, 88
    %v138 = vpop.permute.xlu0 %137
    %s141 = scalar_lea.vmem %s3, 40
    %142 = vst.msk [vmem:[%s141] sm:$0xf] %vm94, %v136
    %143 = vst.msk [vmem:[%s141 + $0x4] sm:$0xf] %vm94, %v138
    %144 = vrot.lane.b32.xlu0 %v92, 80
    %v145 = vpop.permute.xlu0 %144
    %146 = vrot.lane.b32.xlu0 %v93, 80
    %v147 = vpop.permute.xlu0 %146
    %s150 = scalar_lea.vmem %s3, 48
    %151 = vst.msk [vmem:[%s150] sm:$0xf] %vm94, %v145
    %152 = vst.msk [vmem:[%s150 + $0x4] sm:$0xf] %vm94, %v147
    %153 = vrot.lane.b32.xlu0 %v92, 72
    %v154 = vpop.permute.xlu0 %153
    %155 = vrot.lane.b32.xlu0 %v93, 72
    %v156 = vpop.permute.xlu0 %155
    %s159 = scalar_lea.vmem %s3, 56
    %160 = vst.msk [vmem:[%s159] sm:$0xf] %vm94, %v154
    %161 = vst.msk [vmem:[%s159 + $0x4] sm:$0xf] %vm94, %v156
    %162 = vrot.lane.b32.xlu0 %v92, 64
    %v163 = vpop.permute.xlu0 %162
    %164 = vrot.lane.b32.xlu0 %v93, 64
    %v165 = vpop.permute.xlu0 %164
    %s168 = scalar_lea.vmem %s3, 64
    %169 = vst.msk [vmem:[%s168] sm:$0xf] %vm94, %v163
    %170 = vst.msk [vmem:[%s168 + $0x4] sm:$0xf] %vm94, %v165
    %171 = vrot.lane.b32.xlu0 %v92, 56
    %v172 = vpop.permute.xlu0 %171
    %173 = vrot.lane.b32.xlu0 %v93, 56
    %v174 = vpop.permute.xlu0 %173
    %s177 = scalar_lea.vmem %s3, 72
    %178 = vst.msk [vmem:[%s177] sm:$0xf] %vm94, %v172
    %179 = vst.msk [vmem:[%s177 + $0x4] sm:$0xf] %vm94, %v174
    %180 = vrot.lane.b32.xlu0 %v92, 48
    %v181 = vpop.permute.xlu0 %180
    %182 = vrot.lane.b32.xlu0 %v93, 48
    %v183 = vpop.permute.xlu0 %182
    %s186 = scalar_lea.vmem %s3, 80
    %187 = vst.msk [vmem:[%s186] sm:$0xf] %vm94, %v181
    %188 = vst.msk [vmem:[%s186 + $0x4] sm:$0xf] %vm94, %v183
    %189 = vrot.lane.b32.xlu0 %v92, 40
    %v190 = vpop.permute.xlu0 %189
    %191 = vrot.lane.b32.xlu0 %v93, 40
    %v192 = vpop.permute.xlu0 %191
    %s195 = scalar_lea.vmem %s3, 88
    %196 = vst.msk [vmem:[%s195] sm:$0xf] %vm94, %v190
    %197 = vst.msk [vmem:[%s195 + $0x4] sm:$0xf] %vm94, %v192
    // Predicated region
    $region22: #{tpu_custom_call.1} parent=1 // pred_check
      _
    $region23: #{tpu_custom_call.1} parent=1 // pred_check_branch
      %199 = sbr.rel (0) target = $region25
    $region24: #{tpu_custom_call.1} parent=1 // pred_region
      _
    $region25: #{tpu_custom_call.1} parent=1 // pred_fallthru
      _
    // Predicated region
    $region26: #{tpu_custom_call.1} parent=1 // pred_check
      _
    $region27: #{tpu_custom_call.1} parent=1 // pred_check_branch
      %201 = sbr.rel (0) target = $region29
    $region28: #{tpu_custom_call.1} parent=1 // pred_region
      _
    $region29: #{tpu_custom_call.1} parent=1 // pred_fallthru
      _
    %202 = vsyncpa [#allocation3], 1
    %203 = vsyncpa [#allocation5], 1

</llo_original>
